<compile_context>
chip_gen: v5e
topology: v5e:2x2
jax: 0.10.0
libtpu: 0.0.40
codegen_flags: <defaults>
</compile_context>

<pallas_src>
import numpy as np
import jax
import jax.numpy as jnp
from jax.experimental import pallas as pl
from jax.experimental.pallas import tpu as pltpu


def _identity_kernel(x_ref, o_ref):
    # Pure pass-through of the current (block_rows, lane) lane-dense tile.
    o_ref[...] = x_ref[...]


def _choose_slab(n):
    """Pick a lane-dense 2D view (rows, lane) covering >= n elements."""
    lane = 128
    for cand in (16384, 8192, 4096, 2048, 1024, 512, 256, 128):
        if n >= cand:
            lane = cand
            break
    padded = ((n + lane - 1) // lane) * lane
    return padded // lane, lane, padded


def _block_rows(rows, lane, itemsize, target_bytes=4 << 20):
    """~4 MiB blocks, sublane-rounded, preferring a divisor of `rows`.

    Guarantees >=2 grid steps when cheaply possible so v7x's two TensorCores
    both participate (no effect on single-TC v5e/v6e).
    """
    sub = max(8, 32 // max(1, itemsize))          # 8 f32 / 16 bf16 / 32 int8-fp8
    cap = max(1, target_bytes // (lane * itemsize))
    if rows <= cap:
        # Whole slab fits in one block -> split in two for megacore sharding.
        half = rows // 2
        if half >= sub and rows % 2 == 0 and half % sub == 0:
            return half
        return rows                               # full row dim in one block (always legal)
    cap = max((min(cap, rows) // sub) * sub, sub)
    # Prefer the largest sublane-multiple divisor of rows <= cap (no ragged tail).
    for bpr in range(cap, 0, -sub):
        if rows % bpr == 0:
            return bpr
    return cap                                    # ragged tail fallback (still correct)


def _identity_copy_2d(x2d):
    rows, lane = x2d.shape
    bpr = _block_rows(rows, lane, x2d.dtype.itemsize)
    grid = (pl.cdiv(rows, bpr),)
    return pl.pallas_call(
        _identity_kernel,
        out_shape=jax.ShapeDtypeStruct((rows, lane), x2d.dtype),
        grid_spec=pltpu.PrefetchScalarGridSpec(
            num_scalar_prefetch=0,
            grid=grid,
            in_specs=[pl.BlockSpec((bpr, lane), lambda r: (r, 0))],
            out_specs=pl.BlockSpec((bpr, lane), lambda r: (r, 0)),
        ),
        compiler_params=pltpu.CompilerParams(
            dimension_semantics=("parallel",),
            vmem_limit_bytes=32 << 20,            # headroom over v5e's 16 MiB default
        ),
    )(x2d)


@jax.jit
def pallas_identity_copy(features):
    """Materialize an identical copy of `features` via a Pallas TPU kernel.

    Only needed when a framework explicitly requires a fresh buffer; the
    Identity forward itself never calls this (it is a zero-traffic pass-through).
    """
    if features.size == 0:
        return features                           # empty: nothing to copy
    shape = features.shape
    n = int(np.prod(shape)) if shape else 1
    rows, lane, padded = _choose_slab(n)
    flat = features.reshape(-1)
    if padded != n:
        flat = jnp.pad(flat, (0, padded - n))     # lane-align; sliced back below
    out2d = _identity_copy_2d(flat.reshape(rows, lane))
    return out2d.reshape(-1)[:n].reshape(shape)


def identity_edge_forward(features, lens):
    """Pallas-era Identity.forward(features=..., lens=...).

    True identity: zero HBM traffic, returns the inputs unchanged — the exact
    semantics of the torch module (which returns the same tensor objects).
    """
    return features, lens


def arch_init():
    # Parity with Edge.__init__: nn.Parameter(torch.zeros(1)); unused in forward.
    return jnp.zeros((1,), dtype=jnp.float32)


if __name__ == "__main__":
    key = jax.random.PRNGKey(0)
    B, T, D = 2, 8, 32
    kf, kg = jax.random.split(key)
    features = jax.random.normal(kf, (B, T, D), dtype=jnp.float32)
    lens = jnp.array([8, 5], dtype=jnp.int32)

    arch_weight = arch_init()  # deterministic param init (unused in forward)

    # 1) Module forward: true identity (zero-copy fast path).
    out_features, out_lens = identity_edge_forward(features, lens)
    out_features = jax.block_until_ready(out_features)
    out_lens = jax.block_until_ready(out_lens)
    assert out_features.shape == (B, T, D)
    assert out_features.dtype == jnp.float32
    assert np.array_equal(np.asarray(out_features), np.asarray(features))
    assert np.array_equal(np.asarray(out_lens), np.asarray(lens))

    # 2) Pallas copy kernel (for when a fresh buffer must be materialized).
    copied = jax.block_until_ready(pallas_identity_copy(features))
    assert copied.shape == features.shape and copied.dtype == features.dtype
    assert np.array_equal(np.asarray(copied), np.asarray(features))

    # 3) Non-128-divisible element count exercises the pad-and-slice path.
    ragged = jax.random.normal(kg, (3, 7, 5), dtype=jnp.float32)   # 105 elems
    copied_r = jax.block_until_ready(pallas_identity_copy(ragged))
    assert np.array_equal(np.asarray(copied_r), np.asarray(ragged))

    # 4) Larger case exercises multiple grid steps (both v7x TensorCores).
    big = jax.random.normal(kg, (256, 1024), dtype=jnp.float32)    # 1 MiB
    copied_b = jax.block_until_ready(pallas_identity_copy(big))
    assert np.array_equal(np.asarray(copied_b), np.asarray(big))

    print("KERNEL_OK")
</pallas_src>

<mosaic_0001>
module attributes {stable_mosaic.version = 11 : i64} {
  func.func @_identity_kernel(%arg0: i32, %arg1: memref<1x512xf32, #tpu.memory_space<vmem>>, %arg2: memref<1x512xf32, #tpu.memory_space<vmem>>) attributes {dimension_semantics = [#tpu.dimension_semantics<parallel>], iteration_bounds = array<i64: 1>, scalar_prefetch = 0 : i64, scratch_operands = 0 : i64, tpu.core_type = #tpu.core_type<tc>, window_params = [{transform_indices = @transform_0, window_bounds = array<i64: 1, 512>}, {transform_indices = @transform_1, window_bounds = array<i64: 1, 512>}]} {
    %c0 = arith.constant 0 : index
    %c0_0 = arith.constant 0 : index
    %0 = vector.load %arg1[%c0, %c0_0] : memref<1x512xf32, #tpu.memory_space<vmem>>, vector<1x512xf32>
    %c0_1 = arith.constant 0 : index
    %c0_2 = arith.constant 0 : index
    %1 = vector.load %arg2[%c0_1, %c0_2] : memref<1x512xf32, #tpu.memory_space<vmem>>, vector<1x512xf32>
    tpu.vector_store %arg2[%c0_1, %c0_2], %0 {strides = array<i32>} : memref<1x512xf32, #tpu.memory_space<vmem>>, vector<1x512xf32>,
    return
  }
  func.func @transform_0(%arg0: i32) -> (i32, i32) {
    %c0_i32 = arith.constant 0 : i32
    %c0_i32_0 = arith.constant 0 : i32
    return %arg0, %c0_i32 : i32, i32
  }
  func.func @transform_1(%arg0: i32) -> (i32, i32) {
    %c0_i32 = arith.constant 0 : i32
    %c0_i32_0 = arith.constant 0 : i32
    return %arg0, %c0_i32 : i32, i32
  }
}

</mosaic_0001>

<llo_original>
// kernel: pallas_identity_copy.1
$region0: #{pallas_identity_copy.1}
  #allocation0 [shape = 'u32[]', space=smem, size = 0x4, offset = 0x4, fixed_abs, tag = 'smem constant byte address 0x4 - core index']
  #allocation1 [shape = 'u32[72,128]{1,0:T(1,128)}', space=vmem, size = 0x9000, scoped, tag = 'internal scratch']
  %s0 = inlined_call_operand.vmem [shape: f32[1,512], index: 0, kind: input, shape index: {}]
  %s1 = inlined_call_operand.vmem [shape: f32[1,512], index: 1, kind: output, shape index: {}]
  %s2 = sld [smem:[#allocation0]]
  $region14: #{pallas_identity_copy.1} parent=0
    _
  %s4 = ssub.s32 1, %s2
  %s5 = scalar_select 0, %s4, %s2
  // Predicated region
  $region2: #{pallas_identity_copy.1} parent=0 // pred_check
    _
  $region3: #{pallas_identity_copy.1} parent=0 // pred_check_branch
    %7 = sbr.rel (0) target = $region5
  $region4: #{pallas_identity_copy.1} parent=0 // pred_region
    _
  $region5: #{pallas_identity_copy.1} parent=0 // pred_fallthru
    _
  %v8 = vld [vmem:[%s0] sm:$0xf]
  %v9 = vlaneseq
  %vm10 = vcmp.ge.s32.totalorder %v9, 0
  %vm11 = vcmp.lt.s32.totalorder %v9, 512
  %vm12 = vmand %vm10, %vm11
  %13 = vst.msk [vmem:[%s1] sm:$0xf] %vm12, %v8
  // Predicated region
  $region6: #{pallas_identity_copy.1} parent=0 // pred_check
    _
  $region7: #{pallas_identity_copy.1} parent=0 // pred_check_branch
    %15 = sbr.rel (0) target = $region9
  $region8: #{pallas_identity_copy.1} parent=0 // pred_region
    _
  $region9: #{pallas_identity_copy.1} parent=0 // pred_fallthru
    _
  // Predicated region
  $region10: #{pallas_identity_copy.1} parent=0 // pred_check
    _
  $region11: #{pallas_identity_copy.1} parent=0 // pred_check_branch
    %17 = sbr.rel (0) target = $region13
  $region12: #{pallas_identity_copy.1} parent=0 // pred_region
    _
  $region13: #{pallas_identity_copy.1} parent=0 // pred_fallthru
    _

</llo_original>
